<compile_context>
chip_gen: v7x
topology: tpu7x:2x2x1
jax: 0.10.0
libtpu: 0.0.40
codegen_flags: <defaults>
</compile_context>

<pallas_src>
import functools

import jax
import jax.numpy as jnp
from jax.experimental import pallas as pl
from jax.experimental.pallas import tpu as pltpu

LANE = 128        # vreg lane width  (last dim)
SUBLANE = 8       # vreg sublane depth (second-to-last dim, f32)
VMEM_BUDGET_BYTES = 48 * 1024 * 1024   # conservative v7x-safe resident budget


def _round_up(x, m):
    return ((x + m - 1) // m) * m


def _cdiv(a, b):
    return (a + b - 1) // b


def _fused_mlp_kernel(x_ref, *args, num_layers):
    """Fused MLP body.

    x_ref : (tm, F0_pad) bf16 batch tile
    args  : (w0, b0, w1, b1, ..., w_{L-1}, b_{L-1}, o_ref)
            w_l: (K_l_pad, N_l_pad) bf16, b_l: (1, N_l_pad) f32
    """
    o_ref = args[-1]
    h = x_ref[...]                                    # bf16 activations in VMEM
    for layer in range(num_layers):
        w_ref = args[2 * layer]
        b_ref = args[2 * layer + 1]
        # MXU matmul: bf16 operands, f32 accumulation.
        y = jnp.dot(h, w_ref[...], preferred_element_type=jnp.float32)
        y = y + b_ref[...]                            # (1, N_pad) broadcast, VPU
        if layer < num_layers - 1:
            # ReLU in f32 (v5e VPU has no bf16), downcast fused for next matmul.
            h = jnp.maximum(y, 0.0).astype(jnp.bfloat16)
        else:
            h = y                                     # final logits stay f32
    o_ref[...] = h.astype(o_ref.dtype)


def fused_mlp_pallas(x2d, weights, biases, out_dim):
    """Run the fused MLP.

    x2d     : (B, F0) float input (already flattened)
    weights : list of (K_l_pad, N_l_pad) bf16 (PyTorch weight transposed + padded)
    biases  : list of (1, N_l_pad) float32 (zero padded)
    out_dim : true (unpadded) width of the final layer
    """
    B, F0 = x2d.shape
    F0_pad = weights[0].shape[0]
    N_last_pad = weights[-1].shape[1]
    num_layers = len(weights)
    max_n_pad = max(w.shape[1] for w in weights)

    weight_bytes = sum(int(w.size) * w.dtype.itemsize for w in weights)
    bias_bytes = sum(int(b.size) * b.dtype.itemsize for b in biases)

    def vmem_estimate(tm):
        x_tiles = 2 * tm * F0_pad * 2            # bf16 input, double-buffered
        out_tiles = 2 * tm * N_last_pad * 4      # f32 output, double-buffered
        act = 2 * tm * max_n_pad * 4             # live f32 + bf16 activation
        return weight_bytes + bias_bytes + x_tiles + out_tiles + act

    # --- batch tile selection -------------------------------------------------
    B8 = _round_up(B, SUBLANE)
    tm = min(512, B8)                            # large tile amortizes per-step cost
    while tm > SUBLANE and vmem_estimate(tm) > VMEM_BUDGET_BYTES:
        tm = max(SUBLANE, _round_up(tm // 2, SUBLANE))
    # Give the megacore (v7x: 2 TCs) at least 2 grid steps when there is work.
    if _cdiv(B, tm) < 2 and B8 >= 2 * SUBLANE:
        tm = _round_up(_cdiv(B8, 2), SUBLANE)
    grid = (_cdiv(B, tm),)                       # partial last tile handled by Pallas

    # --- input prep: bf16, pad only the feature axis (fusible) ----------------
    x_in = x2d.astype(jnp.bfloat16)
    if F0 != F0_pad:
        x_in = jnp.pad(x_in, ((0, 0), (0, F0_pad - F0)))

    # --- specs ----------------------------------------------------------------
    in_specs = [pl.BlockSpec((tm, F0_pad), lambda i: (i, 0))]
    operands = [x_in]
    for w, b in zip(weights, biases):
        kp, npad = w.shape
        # Invariant blocks: single-buffered, resident in VMEM for every step.
        in_specs.append(pl.BlockSpec((kp, npad), lambda i: (0, 0),
                                     pipeline_mode=pl.Buffered(1)))
        in_specs.append(pl.BlockSpec((1, npad), lambda i: (0, 0),
                                     pipeline_mode=pl.Buffered(1)))
        operands.append(w)
        operands.append(b)

    flops = 2 * B * sum(w.shape[0] * w.shape[1] for w in weights)
    bytes_accessed = (int(x_in.size) * 2 + weight_bytes + bias_bytes
                      + B * N_last_pad * 4)
    cost = pl.CostEstimate(flops=flops, transcendentals=0,
                           bytes_accessed=bytes_accessed)

    vmem_limit = min(int(vmem_estimate(tm) * 1.5) + (2 << 20), 128 * 1024 * 1024)

    kernel = functools.partial(_fused_mlp_kernel, num_layers=num_layers)

    out = pl.pallas_call(
        kernel,
        out_shape=jax.ShapeDtypeStruct((B, N_last_pad), jnp.float32),
        grid=grid,
        in_specs=in_specs,
        out_specs=pl.BlockSpec((tm, N_last_pad), lambda i: (i, 0)),
        compiler_params=pltpu.CompilerParams(
            dimension_semantics=("parallel",),
            vmem_limit_bytes=vmem_limit,
        ),
        cost_estimate=cost,
    )(*operands)

    # TODO(synk): this lane slice (10 of 128) is pure copy overhead; consumers
    # that can mask lanes >= out_dim themselves should take `out` directly.
    return out[:, :out_dim]


class ForwardReLUPallas:
    """JAX/Pallas port of ForwardReLU's forward pass.

    list_len_neurons[0] must equal the flattened feature count of the input.
    Hidden layers get Linear+ReLU; the final layer is Linear only (logits).
    """

    def __init__(self, list_len_neurons, key):
        self.list_len_neurons = list_len_neurons
        self.len_layers = len(list_len_neurons)
        self.weights = []       # padded, transposed (in_pad, out_pad), bf16
        self.biases = []        # padded, (1, out_pad), f32
        self.weights_f32 = []   # unpadded (in, out) f32, for reference checks
        self.biases_f32 = []
        for layer in range(self.len_layers - 1):
            fan_in = list_len_neurons[layer]
            fan_out = list_len_neurons[layer + 1]
            key, kw, kb = jax.random.split(key, 3)
            # Mimic nn.Linear's U(-1/sqrt(fan_in), 1/sqrt(fan_in)) init.
            bound = 1.0 / (fan_in ** 0.5)
            w = jax.random.uniform(kw, (fan_out, fan_in), jnp.float32,
                                   -bound, bound)
            b = jax.random.uniform(kb, (fan_out,), jnp.float32, -bound, bound)
            w_t = w.T                                     # (in, out)
            in_pad = _round_up(fan_in, LANE)
            out_pad = _round_up(fan_out, LANE)
            w_pad = (jnp.zeros((in_pad, out_pad), jnp.float32)
                     .at[:fan_in, :fan_out].set(w_t))
            b_pad = jnp.zeros((1, out_pad), jnp.float32).at[0, :fan_out].set(b)
            self.weights.append(w_pad.astype(jnp.bfloat16))
            self.biases.append(b_pad)
            self.weights_f32.append(w_t)
            self.biases_f32.append(b)

    def __call__(self, x):
        # nn.Flatten: keep batch dim, flatten the rest.
        B = x.shape[0]
        x2d = x.reshape(B, -1)
        return fused_mlp_pallas(x2d, self.weights, self.biases,
                                self.list_len_neurons[-1])


if __name__ == "__main__":
    key = jax.random.PRNGKey(0)
    k_in, k_model = jax.random.split(key)

    # Input [2, 4, 8] flattens to 32 features; MLP 32 -> 64 -> 48 -> 10.
    list_len_neurons = [32, 64, 48, 10]
    x = jax.random.normal(k_in, (2, 4, 8), jnp.float32)

    model = ForwardReLUPallas(list_len_neurons, k_model)
    out = jax.block_until_ready(model(x))

    # Pure-JAX reference with the same bf16-operand / f32-accumulation /
    # bf16-activation recipe as the kernel.
    def ref_forward(x):
        h = x.reshape(x.shape[0], -1).astype(jnp.bfloat16)
        n = len(list_len_neurons) - 1
        for layer in range(n):
            w_t = model.weights_f32[layer].astype(jnp.bfloat16)
            b = model.biases_f32[layer]
            y = jnp.dot(h, w_t, preferred_element_type=jnp.float32) + b
            if layer < n - 1:
                h = jnp.maximum(y, 0.0).astype(jnp.bfloat16)
            else:
                h = y
        return h

    ref = ref_forward(x)
    assert out.shape == (2, list_len_neurons[-1]), out.shape
    assert jnp.allclose(out, ref, atol=1e-2, rtol=1e-2), (out, ref)

    print("KERNEL_OK")
</pallas_src>

<mosaic_0001>
module attributes {stable_mosaic.version = 11 : i64} {
  func.func @_fused_mlp_kernel(%arg0: i32, %arg1: memref<8x128xbf16, #tpu.memory_space<vmem>>, %arg2: memref<128x128xbf16, #tpu.memory_space<vmem>>, %arg3: memref<1x128xf32, #tpu.memory_space<vmem>>, %arg4: memref<128x128xbf16, #tpu.memory_space<vmem>>, %arg5: memref<1x128xf32, #tpu.memory_space<vmem>>, %arg6: memref<128x128xbf16, #tpu.memory_space<vmem>>, %arg7: memref<1x128xf32, #tpu.memory_space<vmem>>, %arg8: memref<8x128xf32, #tpu.memory_space<vmem>>) attributes {dimension_semantics = [#tpu.dimension_semantics<parallel>], iteration_bounds = array<i64: 1>, scalar_prefetch = 0 : i64, scratch_operands = 0 : i64, tpu.core_type = #tpu.core_type<tc>, window_params = [{transform_indices = @transform_0, window_bounds = array<i64: 8, 128>}, {pipeline_mode = #tpu.pipeline_mode<synchronous>, transform_indices = @transform_1, window_bounds = array<i64: 128, 128>}, {pipeline_mode = #tpu.pipeline_mode<synchronous>, transform_indices = @transform_2, window_bounds = array<i64: 1, 128>}, {pipeline_mode = #tpu.pipeline_mode<synchronous>, transform_indices = @transform_3, window_bounds = array<i64: 128, 128>}, {pipeline_mode = #tpu.pipeline_mode<synchronous>, transform_indices = @transform_4, window_bounds = array<i64: 1, 128>}, {pipeline_mode = #tpu.pipeline_mode<synchronous>, transform_indices = @transform_5, window_bounds = array<i64: 128, 128>}, {pipeline_mode = #tpu.pipeline_mode<synchronous>, transform_indices = @transform_6, window_bounds = array<i64: 1, 128>}, {transform_indices = @transform_7, window_bounds = array<i64: 8, 128>}]} {
    %c0 = arith.constant 0 : index
    %c0_0 = arith.constant 0 : index
    %0 = vector.load %arg1[%c0, %c0_0] : memref<8x128xbf16, #tpu.memory_space<vmem>>, vector<8x128xbf16>
    %c0_1 = arith.constant 0 : index
    %c0_2 = arith.constant 0 : index
    %1 = vector.load %arg2[%c0_1, %c0_2] : memref<128x128xbf16, #tpu.memory_space<vmem>>, vector<128x128xbf16>
    %cst = arith.constant dense<0.000000e+00> : vector<8x128xf32>
    %2 = tpu.matmul %0, %1, %cst {dimension_numbers = #tpu.dot_dimension_numbers<[1], [0], [0], [1], [0, 0, 1, 1], [], []>} : vector<8x128xbf16>, vector<128x128xbf16>, vector<8x128xf32> -> vector<8x128xf32>
    %c0_3 = arith.constant 0 : index
    %c0_4 = arith.constant 0 : index
    %3 = vector.load %arg3[%c0_3, %c0_4] : memref<1x128xf32, #tpu.memory_space<vmem>>, vector<1x128xf32>
    %4 = vector.broadcast %3 : vector<1x128xf32> to vector<8x128xf32>
    %5 = arith.addf %2, %4 : vector<8x128xf32>
    %cst_5 = arith.constant 0.000000e+00 : f32
    %6 = vector.broadcast %cst_5 : f32 to vector<8x128xf32>
    %7 = arith.maximumf %5, %6 : vector<8x128xf32>
    %8 = arith.truncf %7 : vector<8x128xf32> to vector<8x128xbf16>
    %c0_6 = arith.constant 0 : index
    %c0_7 = arith.constant 0 : index
    %9 = vector.load %arg4[%c0_6, %c0_7] : memref<128x128xbf16, #tpu.memory_space<vmem>>, vector<128x128xbf16>
    %cst_8 = arith.constant dense<0.000000e+00> : vector<8x128xf32>
    %10 = tpu.matmul %8, %9, %cst_8 {dimension_numbers = #tpu.dot_dimension_numbers<[1], [0], [0], [1], [0, 0, 1, 1], [], []>} : vector<8x128xbf16>, vector<128x128xbf16>, vector<8x128xf32> -> vector<8x128xf32>
    %c0_9 = arith.constant 0 : index
    %c0_10 = arith.constant 0 : index
    %11 = vector.load %arg5[%c0_9, %c0_10] : memref<1x128xf32, #tpu.memory_space<vmem>>, vector<1x128xf32>
    %12 = vector.broadcast %11 : vector<1x128xf32> to vector<8x128xf32>
    %13 = arith.addf %10, %12 : vector<8x128xf32>
    %cst_11 = arith.constant 0.000000e+00 : f32
    %14 = vector.broadcast %cst_11 : f32 to vector<8x128xf32>
    %15 = arith.maximumf %13, %14 : vector<8x128xf32>
    %16 = arith.truncf %15 : vector<8x128xf32> to vector<8x128xbf16>
    %c0_12 = arith.constant 0 : index
    %c0_13 = arith.constant 0 : index
    %17 = vector.load %arg6[%c0_12, %c0_13] : memref<128x128xbf16, #tpu.memory_space<vmem>>, vector<128x128xbf16>
    %cst_14 = arith.constant dense<0.000000e+00> : vector<8x128xf32>
    %18 = tpu.matmul %16, %17, %cst_14 {dimension_numbers = #tpu.dot_dimension_numbers<[1], [0], [0], [1], [0, 0, 1, 1], [], []>} : vector<8x128xbf16>, vector<128x128xbf16>, vector<8x128xf32> -> vector<8x128xf32>
    %c0_15 = arith.constant 0 : index
    %c0_16 = arith.constant 0 : index
    %19 = vector.load %arg7[%c0_15, %c0_16] : memref<1x128xf32, #tpu.memory_space<vmem>>, vector<1x128xf32>
    %20 = vector.broadcast %19 : vector<1x128xf32> to vector<8x128xf32>
    %21 = arith.addf %18, %20 : vector<8x128xf32>
    %c0_17 = arith.constant 0 : index
    %c0_18 = arith.constant 0 : index
    %22 = vector.load %arg8[%c0_17, %c0_18] : memref<8x128xf32, #tpu.memory_space<vmem>>, vector<8x128xf32>
    tpu.vector_store %arg8[%c0_17, %c0_18], %21 {strides = array<i32>} : memref<8x128xf32, #tpu.memory_space<vmem>>, vector<8x128xf32>,
    return
  }
  func.func @transform_0(%arg0: i32) -> (i32, i32) {
    %c0_i32 = arith.constant 0 : i32
    %c0_i32_0 = arith.constant 0 : i32
    return %arg0, %c0_i32 : i32, i32
  }
  func.func @transform_1(%arg0: i32) -> (i32, i32) {
    %c0_i32 = arith.constant 0 : i32
    %c0_i32_0 = arith.constant 0 : i32
    %c0_i32_1 = arith.constant 0 : i32
    return %c0_i32, %c0_i32_0 : i32, i32
  }
  func.func @transform_2(%arg0: i32) -> (i32, i32) {
    %c0_i32 = arith.constant 0 : i32
    %c0_i32_0 = arith.constant 0 : i32
    %c0_i32_1 = arith.constant 0 : i32
    return %c0_i32, %c0_i32_0 : i32, i32
  }
  func.func @transform_3(%arg0: i32) -> (i32, i32) {
    %c0_i32 = arith.constant 0 : i32
    %c0_i32_0 = arith.constant 0 : i32
    %c0_i32_1 = arith.constant 0 : i32
    return %c0_i32, %c0_i32_0 : i32, i32
  }
  func.func @transform_4(%arg0: i32) -> (i32, i32) {
    %c0_i32 = arith.constant 0 : i32
    %c0_i32_0 = arith.constant 0 : i32
    %c0_i32_1 = arith.constant 0 : i32
    return %c0_i32, %c0_i32_0 : i32, i32
  }
  func.func @transform_5(%arg0: i32) -> (i32, i32) {
    %c0_i32 = arith.constant 0 : i32
    %c0_i32_0 = arith.constant 0 : i32
    %c0_i32_1 = arith.constant 0 : i32
    return %c0_i32, %c0_i32_0 : i32, i32
  }
  func.func @transform_6(%arg0: i32) -> (i32, i32) {
    %c0_i32 = arith.constant 0 : i32
    %c0_i32_0 = arith.constant 0 : i32
    %c0_i32_1 = arith.constant 0 : i32
    return %c0_i32, %c0_i32_0 : i32, i32
  }
  func.func @transform_7(%arg0: i32) -> (i32, i32) {
    %c0_i32 = arith.constant 0 : i32
    %c0_i32_0 = arith.constant 0 : i32
    return %arg0, %c0_i32 : i32, i32
  }
}

</mosaic_0001>

<llo_original>
// kernel: tpu_custom_call.1
$region0: #{tpu_custom_call.1}
  #allocation0 [shape = 'u32[]', space=smem, size = 0x4, offset = 0x4, fixed_abs, tag = 'smem constant byte address 0x4 - core index']
  #allocation1 [shape = 'u32[144,128]{1,0:T(1,128)}', space=vmem, size = 0x12000, scoped, tag = 'internal scratch']
  %s0 = inlined_call_operand.hbm [shape: bf16[2,128], index: 0, kind: input, shape index: {}]
  %s1 = inlined_call_operand.hbm [shape: bf16[128,128], index: 1, kind: input, shape index: {}]
  %s2 = inlined_call_operand.vmem [shape: f32[1,128], index: 2, kind: input, shape index: {}]
  %s3 = inlined_call_operand.hbm [shape: bf16[128,128], index: 3, kind: input, shape index: {}]
  %s4 = inlined_call_operand.vmem [shape: f32[1,128], index: 4, kind: input, shape index: {}]
  %s5 = inlined_call_operand.hbm [shape: bf16[128,128], index: 5, kind: input, shape index: {}]
  %s6 = inlined_call_operand.vmem [shape: f32[1,128], index: 6, kind: input, shape index: {}]
  %s7 = inlined_call_operand.hbm [shape: f32[2,128], index: 7, kind: output, shape index: {}]
  %s8 = sld [smem:[#allocation0]]
  $region54: #{tpu_custom_call.1} parent=0
    _
  %s10 = ssub.s32 1, %s8
  %s11 = scalar_select 0, %s10, %s8
  $region1: #{tpu_custom_call.1} parent=0
    #allocation2 [shape = 'u8[2048]{0}', space=vmem, size = 0x800, scoped, tag = 'input window, operand 0, single buffered']
    #allocation3 [shape = 's32[1]{0}', space=sflag, size = 0x4, scoped, tag = 'scoped memory for tpu_custom_call.1']
    #allocation4 [shape = 's32[1]{0}', space=sflag, size = 0x4, scoped, tag = 'scoped memory for tpu_custom_call.1']
    #allocation5 [shape = 'u8[32768]{0}', space=vmem, size = 0x8000, scoped, tag = 'input window, operand 1, single buffered']
    #allocation6 [shape = 's32[1]{0}', space=sflag, size = 0x4, scoped, tag = 'scoped memory for tpu_custom_call.1']
    #allocation7 [shape = 'u8[32768]{0}', space=vmem, size = 0x8000, scoped, tag = 'input window, operand 3, single buffered']
    #allocation8 [shape = 'u8[32768]{0}', space=vmem, size = 0x8000, scoped, tag = 'input window, operand 5, single buffered']
    #allocation9 [shape = 's32[1]{0}', space=sflag, size = 0x4, scoped, tag = 'scoped memory for tpu_custom_call.1']
    #allocation10 [shape = 'u8[4096]{0}', space=vmem, size = 0x1000, scoped, tag = 'output window, operand 0, single buffered']
    %12 = vsyncpa [#allocation3], 0
    %13 = vsyncpa [#allocation6], 0
    %14 = vsyncpa [#allocation9], 0
    %15 = vsyncpa [#allocation4], 0
    // Predicated region
    $region2: #{tpu_custom_call.1} parent=1 // pred_check
      _
    $region3: #{tpu_custom_call.1} parent=1 // pred_check_branch
      %17 = sbr.rel (0) target = $region5
    $region4: #{tpu_custom_call.1} parent=1 // pred_region
      %s19 = ssub.s32 64, 16
      %20 = vsyncadd [#allocation3], %s19
      %s21 = sshll.u32 [#allocation2], 4
      %s22 = int_to_ptr.vmem [resolvable:$true] %s21
      %27 = dma.hbm_to_vmem [thread:$0]  %s0, 16, %s22, [#allocation3], 16, 16, 1
    $region5: #{tpu_custom_call.1} parent=1 // pred_fallthru
      _
    // Predicated region
    $region6: #{tpu_custom_call.1} parent=1 // pred_check
      _
    $region7: #{tpu_custom_call.1} parent=1 // pred_check_branch
      %29 = sbr.rel (0) target = $region9
    $region8: #{tpu_custom_call.1} parent=1 // pred_region
      %s31 = ssub.s32 1024, 1024
      %32 = vsyncadd [#allocation6], %s31
      %s33 = sshll.u32 [#allocation5], 4
      %s34 = int_to_ptr.vmem [resolvable:$true] %s33
      %39 = dma.hbm_to_vmem [thread:$0]  %s1, 1024, %s34, [#allocation6], 64, 64, 4
    $region9: #{tpu_custom_call.1} parent=1 // pred_fallthru
      _
    // Predicated region
    $region10: #{tpu_custom_call.1} parent=1 // pred_check
      _
    $region11: #{tpu_custom_call.1} parent=1 // pred_check_branch
      %41 = sbr.rel (0) target = $region13
    $region12: #{tpu_custom_call.1} parent=1 // pred_region
      _
    $region13: #{tpu_custom_call.1} parent=1 // pred_fallthru
      _
    // Predicated region
    $region14: #{tpu_custom_call.1} parent=1 // pred_check
      _
    $region15: #{tpu_custom_call.1} parent=1 // pred_check_branch
      %43 = sbr.rel (0) target = $region17
    $region16: #{tpu_custom_call.1} parent=1 // pred_region
      %s45 = ssub.s32 1024, 1024
      %46 = vsyncadd [#allocation6], %s45
      %s47 = sshll.u32 [#allocation7], 4
      %s48 = int_to_ptr.vmem [resolvable:$true] %s47
      %53 = dma.hbm_to_vmem [thread:$0]  %s3, 1024, %s48, [#allocation6], 64, 64, 4
    $region17: #{tpu_custom_call.1} parent=1 // pred_fallthru
      _
    // Predicated region
    $region18: #{tpu_custom_call.1} parent=1 // pred_check
      _
    $region19: #{tpu_custom_call.1} parent=1 // pred_check_branch
      %55 = sbr.rel (0) target = $region21
    $region20: #{tpu_custom_call.1} parent=1 // pred_region
      _
    $region21: #{tpu_custom_call.1} parent=1 // pred_fallthru
      _
    // Predicated region
    $region22: #{tpu_custom_call.1} parent=1 // pred_check
      _
    $region23: #{tpu_custom_call.1} parent=1 // pred_check_branch
      %57 = sbr.rel (0) target = $region25
    $region24: #{tpu_custom_call.1} parent=1 // pred_region
      %s59 = ssub.s32 1024, 1024
      %60 = vsyncadd [#allocation9], %s59
      %s61 = sshll.u32 [#allocation8], 4
      %s62 = int_to_ptr.vmem [resolvable:$true] %s61
      %67 = dma.hbm_to_vmem [thread:$0]  %s5, 1024, %s62, [#allocation9], 64, 64, 4
    $region25: #{tpu_custom_call.1} parent=1 // pred_fallthru
      _
    // Predicated region
    $region26: #{tpu_custom_call.1} parent=1 // pred_check
      _
    $region27: #{tpu_custom_call.1} parent=1 // pred_check_branch
      %69 = sbr.rel (0) target = $region29
    $region28: #{tpu_custom_call.1} parent=1 // pred_region
      _
    $region29: #{tpu_custom_call.1} parent=1 // pred_fallthru
      _
    // Predicated region
    $region30: #{tpu_custom_call.1} parent=1 // pred_check
      _
    $region31: #{tpu_custom_call.1} parent=1 // pred_check_branch
      %71 = sbr.rel (0) target = $region33
    $region32: #{tpu_custom_call.1} parent=1 // pred_region
      %72 = dma.done [#allocation3], 64
    $region33: #{tpu_custom_call.1} parent=1 // pred_fallthru
      _
    // Predicated region
    $region34: #{tpu_custom_call.1} parent=1 // pred_check
      _
    $region35: #{tpu_custom_call.1} parent=1 // pred_check_branch
      %74 = sbr.rel (0) target = $region37
    $region36: #{tpu_custom_call.1} parent=1 // pred_region
      %75 = dma.done [#allocation6], 1024
    $region37: #{tpu_custom_call.1} parent=1 // pred_fallthru
      _
    // Predicated region
    $region38: #{tpu_custom_call.1} parent=1 // pred_check
      _
    $region39: #{tpu_custom_call.1} parent=1 // pred_check_branch
      %77 = sbr.rel (0) target = $region41
    $region40: #{tpu_custom_call.1} parent=1 // pred_region
      %78 = dma.done [#allocation6], 1024
    $region41: #{tpu_custom_call.1} parent=1 // pred_fallthru
      _
    // Predicated region
    $region42: #{tpu_custom_call.1} parent=1 // pred_check
      _
    $region43: #{tpu_custom_call.1} parent=1 // pred_check_branch
      %80 = sbr.rel (0) target = $region45
    $region44: #{tpu_custom_call.1} parent=1 // pred_region
      %81 = dma.done [#allocation9], 1024
    $region45: #{tpu_custom_call.1} parent=1 // pred_fallthru
      _
    %v83 = vld [vmem:[#allocation2] sm:$0x1]
    %v84 = vld [vmem:[#allocation2 + $0x1] sm:$0x1]
    %v85 = vld [vmem:[#allocation2 + $0x2] sm:$0x1]
    %v86 = vld [vmem:[#allocation2 + $0x3] sm:$0x1]
    %v87 = vld [vmem:[#allocation5] sm:$0xf]
    %v88 = vld [vmem:[#allocation5 + $0x4] sm:$0xf]
    %v89 = vld [vmem:[#allocation5 + $0x8] sm:$0xf]
    %v90 = vld [vmem:[#allocation5 + $0xc] sm:$0xf]
    %v91 = vld [vmem:[#allocation5 + $0x10] sm:$0xf]
    %v92 = vld [vmem:[#allocation5 + $0x14] sm:$0xf]
    %v93 = vld [vmem:[#allocation5 + $0x18] sm:$0xf]
    %v94 = vld [vmem:[#allocation5 + $0x1c] sm:$0xf]
    %v95 = vld [vmem:[#allocation5 + $0x20] sm:$0xf]
    %v96 = vld [vmem:[#allocation5 + $0x24] sm:$0xf]
    %v97 = vld [vmem:[#allocation5 + $0x28] sm:$0xf]
    %v98 = vld [vmem:[#allocation5 + $0x2c] sm:$0xf]
    %v99 = vld [vmem:[#allocation5 + $0x30] sm:$0xf]
    %v100 = vld [vmem:[#allocation5 + $0x34] sm:$0xf]
    %v101 = vld [vmem:[#allocation5 + $0x38] sm:$0xf]
    %v102 = vld [vmem:[#allocation5 + $0x3c] sm:$0xf]
    %v103 = vld [vmem:[%s2] sm:$0x1]
    %v105 = vlaneseq
    %v106 = vshrl.u32 %v105, 7
    %v107 = vsub.s32 0, %v106
    %v108 = vrot.slane %v103, %v107
    %v114 = vcombine.low %v83, %v84
    %v115 = vcombine.low %v85, %v86
    %v117 = vunpack.c.l.s4 1966171168
    %v118 = vunpack.c.0.s8 %v117
    %v119 = vlaneseq
    %v120 = vshrl.u32 %v119, 7
    %v121 = vsub.s32 %v118, %v120
    %v122 = vrot.slane %v114, %v121
    %v124 = vunpack.c.l.s4 1966171168
    %v125 = vunpack.c.0.s8 %v124
    %v126 = vlaneseq
    %v127 = vshrl.u32 %v126, 7
    %v128 = vsub.s32 %v125, %v127
    %v129 = vrot.slane %v115, %v128
    %v130 = vcombine.low %v122, %v129
    %v132 = vunpack.c.l.s4 1966171168
    %v133 = vunpack.c.0.s8 %v132
    %v134 = vlaneseq
    %v135 = vshrl.u32 %v134, 7
    %v136 = vsub.s32 %v133, %v135
    %v137 = vrot.slane %v130, %v136
    %v155 = vunpack.c.l.b16 %v87
    %v156 = vunpack.c.l.b16 %v88
    %v157 = vunpack.c.l.b16 %v89
    %v158 = vunpack.c.l.b16 %v90
    %v159 = vunpack.c.l.b16 %v91
    %v160 = vunpack.c.l.b16 %v92
    %v161 = vunpack.c.l.b16 %v93
    %v162 = vunpack.c.l.b16 %v94
    %v163 = vunpack.c.l.b16 %v95
    %v164 = vunpack.c.l.b16 %v96
    %v165 = vunpack.c.l.b16 %v97
    %v166 = vunpack.c.l.b16 %v98
    %v167 = vunpack.c.l.b16 %v99
    %v168 = vunpack.c.l.b16 %v100
    %v169 = vunpack.c.l.b16 %v101
    %v170 = vunpack.c.l.b16 %v102
    %v171 = vpack.c.b16 %v156, %v155
    %v172 = vpack.c.b16 %v158, %v157
    %v173 = vpack.c.b16 %v160, %v159
    %v174 = vpack.c.b16 %v162, %v161
    %v175 = vpack.c.b16 %v164, %v163
    %v176 = vpack.c.b16 %v166, %v165
    %v177 = vpack.c.b16 %v168, %v167
    %v178 = vpack.c.b16 %v170, %v169
    %187 = vmatprep.subr.bf16.mxu0 0
    %188 = vmatpush1.bf16.msra.mxu0 %v171
    %189 = vmatprep.subr.bf16.mxu0 0
    %190 = vmatpush1.bf16.msra.mxu0 %v172
    %191 = vmatprep.subr.bf16.mxu0 0
    %192 = vmatpush1.bf16.msra.mxu0 %v173
    %193 = vmatprep.subr.bf16.mxu0 0
    %194 = vmatpush1.bf16.msra.mxu0 %v174
    %195 = vmatprep.subr.bf16.mxu0 0
    %196 = vmatpush1.bf16.msra.mxu0 %v175
    %197 = vmatprep.subr.bf16.mxu0 0
    %198 = vmatpush1.bf16.msra.mxu0 %v176
    %199 = vmatprep.subr.bf16.mxu0 0
    %200 = vmatpush1.bf16.msra.mxu0 %v177
    %201 = vmatprep.subr.bf16.mxu0 0
    %202 = vmatpush1.bf16.msra.mxu0 %v178
    %203 = vmatprep.subr.bf16.mxu0 0
    %204 = vmatpush1.bf16.msra.mxu0 0
    %205 = vmatprep.subr.bf16.mxu0 0
    %206 = vmatpush1.bf16.msra.mxu0 0
    %207 = vmatprep.subr.bf16.mxu0 0
    %208 = vmatpush1.bf16.msra.mxu0 0
    %209 = vmatprep.subr.bf16.mxu0 0
    %210 = vmatpush1.bf16.msra.mxu0 0
    %211 = vmatprep.subr.bf16.mxu0 0
    %212 = vmatpush1.bf16.msra.mxu0 0
    %213 = vmatprep.subr.bf16.mxu0 0
    %214 = vmatpush1.bf16.msra.mxu0 0
    %215 = vmatprep.subr.bf16.mxu0 0
    %216 = vmatpush1.bf16.msra.mxu0 0
    %217 = vmatprep.subr.bf16.mxu0 0
    %218 = vmatpush1.bf16.msra.mxu0 0
    %219 = vmatprep.mubr.bf16.mxu0 0
    %220 = vmatmul.mubr.bf16.gmra.mrb[0].mxu0 %v137
    %v221 = vpop.f32.mrb[0].mxu0
    %v222 = vadd.f32 %v108, %v221
    %v223 = vpop.f32.mrb[0].mxu0
    %v224 = vpop.f32.mrb[0].mxu0
    %v225 = vpop.f32.mrb[0].mxu0
    %226 = vdwg.mxu0
    %v227 = vmax.f32 %v222, 0.0
    %v228 = vpack.c.bf16 %v227, %v227
    %v229 = vld [vmem:[#allocation7] sm:$0xf]
    %v230 = vld [vmem:[#allocation7 + $0x4] sm:$0xf]
    %v231 = vld [vmem:[#allocation7 + $0x8] sm:$0xf]
    %v232 = vld [vmem:[#allocation7 + $0xc] sm:$0xf]
    %v233 = vld [vmem:[#allocation7 + $0x10] sm:$0xf]
    %v234 = vld [vmem:[#allocation7 + $0x14] sm:$0xf]
    %v235 = vld [vmem:[#allocation7 + $0x18] sm:$0xf]
    %v236 = vld [vmem:[#allocation7 + $0x1c] sm:$0xf]
    %v237 = vld [vmem:[#allocation7 + $0x20] sm:$0xf]
    %v238 = vld [vmem:[#allocation7 + $0x24] sm:$0xf]
    %v239 = vld [vmem:[#allocation7 + $0x28] sm:$0xf]
    %v240 = vld [vmem:[#allocation7 + $0x2c] sm:$0xf]
    %v241 = vld [vmem:[#allocation7 + $0x30] sm:$0xf]
    %v242 = vld [vmem:[#allocation7 + $0x34] sm:$0xf]
    %v243 = vld [vmem:[#allocation7 + $0x38] sm:$0xf]
    %v244 = vld [vmem:[#allocation7 + $0x3c] sm:$0xf]
    %v245 = vld [vmem:[%s4] sm:$0x1]
    %v247 = vlaneseq
    %v248 = vshrl.u32 %v247, 7
    %v249 = vsub.s32 0, %v248
    %v250 = vrot.slane %v245, %v249
    %v268 = vunpack.c.l.b16 %v229
    %v269 = vunpack.c.l.b16 %v230
    %v270 = vunpack.c.l.b16 %v231
    %v271 = vunpack.c.l.b16 %v232
    %v272 = vunpack.c.l.b16 %v233
    %v273 = vunpack.c.l.b16 %v234
    %v274 = vunpack.c.l.b16 %v235
    %v275 = vunpack.c.l.b16 %v236
    %v276 = vunpack.c.l.b16 %v237
    %v277 = vunpack.c.l.b16 %v238
    %v278 = vunpack.c.l.b16 %v239
    %v279 = vunpack.c.l.b16 %v240
    %v280 = vunpack.c.l.b16 %v241
    %v281 = vunpack.c.l.b16 %v242
    %v282 = vunpack.c.l.b16 %v243
    %v283 = vunpack.c.l.b16 %v244
    %v284 = vpack.c.b16 %v269, %v268
    %v285 = vpack.c.b16 %v271, %v270
    %v286 = vpack.c.b16 %v273, %v272
    %v287 = vpack.c.b16 %v275, %v274
    %v288 = vpack.c.b16 %v277, %v276
    %v289 = vpack.c.b16 %v279, %v278
    %v290 = vpack.c.b16 %v281, %v280
    %v291 = vpack.c.b16 %v283, %v282
    %300 = vmatprep.subr.bf16.mxu0 0
    %301 = vmatpush1.bf16.msra.mxu0 %v284
    %302 = vmatprep.subr.bf16.mxu0 0
    %303 = vmatpush1.bf16.msra.mxu0 %v285
    %304 = vmatprep.subr.bf16.mxu0 0
    %305 = vmatpush1.bf16.msra.mxu0 %v286
    %306 = vmatprep.subr.bf16.mxu0 0
    %307 = vmatpush1.bf16.msra.mxu0 %v287
    %308 = vmatprep.subr.bf16.mxu0 0
    %309 = vmatpush1.bf16.msra.mxu0 %v288
    %310 = vmatprep.subr.bf16.mxu0 0
    %311 = vmatpush1.bf16.msra.mxu0 %v289
    %312 = vmatprep.subr.bf16.mxu0 0
    %313 = vmatpush1.bf16.msra.mxu0 %v290
    %314 = vmatprep.subr.bf16.mxu0 0
    %315 = vmatpush1.bf16.msra.mxu0 %v291
    %316 = vmatprep.subr.bf16.mxu0 0
    %317 = vmatpush1.bf16.msra.mxu0 0
    %318 = vmatprep.subr.bf16.mxu0 0
    %319 = vmatpush1.bf16.msra.mxu0 0
    %320 = vmatprep.subr.bf16.mxu0 0
    %321 = vmatpush1.bf16.msra.mxu0 0
    %322 = vmatprep.subr.bf16.mxu0 0
    %323 = vmatpush1.bf16.msra.mxu0 0
    %324 = vmatprep.subr.bf16.mxu0 0
    %325 = vmatpush1.bf16.msra.mxu0 0
    %326 = vmatprep.subr.bf16.mxu0 0
    %327 = vmatpush1.bf16.msra.mxu0 0
    %328 = vmatprep.subr.bf16.mxu0 0
    %329 = vmatpush1.bf16.msra.mxu0 0
    %330 = vmatprep.subr.bf16.mxu0 0
    %331 = vmatpush1.bf16.msra.mxu0 0
    %332 = vmatprep.mubr.bf16.mxu0 0
    %333 = vmatmul.mubr.bf16.gmra.mrb[0].mxu0 %v228
    %v334 = vpop.f32.mrb[0].mxu0
    %v335 = vadd.f32 %v250, %v334
    %v336 = vpop.f32.mrb[0].mxu0
    %v337 = vpop.f32.mrb[0].mxu0
    %v338 = vpop.f32.mrb[0].mxu0
    %339 = vdwg.mxu0
    %v340 = vmax.f32 %v335, 0.0
    %v341 = vpack.c.bf16 %v340, %v340
    %v342 = vld [vmem:[#allocation8] sm:$0xf]
    %v343 = vld [vmem:[#allocation8 + $0x4] sm:$0xf]
    %v344 = vld [vmem:[#allocation8 + $0x8] sm:$0xf]
    %v345 = vld [vmem:[#allocation8 + $0xc] sm:$0xf]
    %v346 = vld [vmem:[#allocation8 + $0x10] sm:$0xf]
    %v347 = vld [vmem:[#allocation8 + $0x14] sm:$0xf]
    %v348 = vld [vmem:[#allocation8 + $0x18] sm:$0xf]
    %v349 = vld [vmem:[#allocation8 + $0x1c] sm:$0xf]
    %v350 = vld [vmem:[#allocation8 + $0x20] sm:$0xf]
    %v351 = vld [vmem:[#allocation8 + $0x24] sm:$0xf]
    %v352 = vld [vmem:[#allocation8 + $0x28] sm:$0xf]
    %v353 = vld [vmem:[#allocation8 + $0x2c] sm:$0xf]
    %v354 = vld [vmem:[#allocation8 + $0x30] sm:$0xf]
    %v355 = vld [vmem:[#allocation8 + $0x34] sm:$0xf]
    %v356 = vld [vmem:[#allocation8 + $0x38] sm:$0xf]
    %v357 = vld [vmem:[#allocation8 + $0x3c] sm:$0xf]
    %v358 = vld [vmem:[%s6] sm:$0x1]
    %v360 = vlaneseq
    %v361 = vshrl.u32 %v360, 7
    %v362 = vsub.s32 0, %v361
    %v363 = vrot.slane %v358, %v362
    %v381 = vunpack.c.l.b16 %v342
    %v382 = vunpack.c.l.b16 %v343
    %v383 = vunpack.c.l.b16 %v344
    %v384 = vunpack.c.l.b16 %v345
    %v385 = vunpack.c.l.b16 %v346
    %v386 = vunpack.c.l.b16 %v347
    %v387 = vunpack.c.l.b16 %v348
    %v388 = vunpack.c.l.b16 %v349
    %v389 = vunpack.c.l.b16 %v350
    %v390 = vunpack.c.l.b16 %v351
    %v391 = vunpack.c.l.b16 %v352
    %v392 = vunpack.c.l.b16 %v353
    %v393 = vunpack.c.l.b16 %v354
    %v394 = vunpack.c.l.b16 %v355
    %v395 = vunpack.c.l.b16 %v356
    %v396 = vunpack.c.l.b16 %v357
    %v397 = vpack.c.b16 %v382, %v381
    %v398 = vpack.c.b16 %v384, %v383
    %v399 = vpack.c.b16 %v386, %v385
    %v400 = vpack.c.b16 %v388, %v387
    %v401 = vpack.c.b16 %v390, %v389
    %v402 = vpack.c.b16 %v392, %v391
    %v403 = vpack.c.b16 %v394, %v393
    %v404 = vpack.c.b16 %v396, %v395
    %413 = vmatprep.subr.bf16.mxu0 0
    %414 = vmatpush1.bf16.msra.mxu0 %v397
    %415 = vmatprep.subr.bf16.mxu0 0
    %416 = vmatpush1.bf16.msra.mxu0 %v398
    %417 = vmatprep.subr.bf16.mxu0 0
    %418 = vmatpush1.bf16.msra.mxu0 %v399
    %419 = vmatprep.subr.bf16.mxu0 0
    %420 = vmatpush1.bf16.msra.mxu0 %v400
    %421 = vmatprep.subr.bf16.mxu0 0
    %422 = vmatpush1.bf16.msra.mxu0 %v401
    %423 = vmatprep.subr.bf16.mxu0 0
    %424 = vmatpush1.bf16.msra.mxu0 %v402
    %425 = vmatprep.subr.bf16.mxu0 0
    %426 = vmatpush1.bf16.msra.mxu0 %v403
    %427 = vmatprep.subr.bf16.mxu0 0
    %428 = vmatpush1.bf16.msra.mxu0 %v404
    %429 = vmatprep.subr.bf16.mxu0 0
    %430 = vmatpush1.bf16.msra.mxu0 0
    %431 = vmatprep.subr.bf16.mxu0 0
    %432 = vmatpush1.bf16.msra.mxu0 0
    %433 = vmatprep.subr.bf16.mxu0 0
    %434 = vmatpush1.bf16.msra.mxu0 0
    %435 = vmatprep.subr.bf16.mxu0 0
    %436 = vmatpush1.bf16.msra.mxu0 0
    %437 = vmatprep.subr.bf16.mxu0 0
    %438 = vmatpush1.bf16.msra.mxu0 0
    %439 = vmatprep.subr.bf16.mxu0 0
    %440 = vmatpush1.bf16.msra.mxu0 0
    %441 = vmatprep.subr.bf16.mxu0 0
    %442 = vmatpush1.bf16.msra.mxu0 0
    %443 = vmatprep.subr.bf16.mxu0 0
    %444 = vmatpush1.bf16.msra.mxu0 0
    %445 = vmatprep.mubr.bf16.mxu0 0
    %446 = vmatmul.mubr.bf16.gmra.mrb[0].mxu0 %v341
    %v447 = vpop.f32.mrb[0].mxu0
    %v448 = vadd.f32 %v363, %v447
    %v449 = vpop.f32.mrb[0].mxu0
    %v450 = vpop.f32.mrb[0].mxu0
    %v451 = vpop.f32.mrb[0].mxu0
    %452 = vdwg.mxu0
    %453 = vst [vmem:[#allocation10] sm:$0xff] %v448
    // Predicated region
    $region46: #{tpu_custom_call.1} parent=1 // pred_check
      _
    $region47: #{tpu_custom_call.1} parent=1 // pred_check_branch
      %455 = sbr.rel (0) target = $region49
    $region48: #{tpu_custom_call.1} parent=1 // pred_region
      %s457 = ssub.s32 128, 32
      %458 = vsyncadd [#allocation4], %s457
      %s459 = sshll.u32 [#allocation10], 4
      %s460 = int_to_ptr.vmem [resolvable:$true] %s459
      %465 = dma.vmem_to_hbm [thread:$0]  %s460, 32, %s7, [#allocation4], 32, 32, 2
    $region49: #{tpu_custom_call.1} parent=1 // pred_fallthru
      _
    // Predicated region
    $region50: #{tpu_custom_call.1} parent=1 // pred_check
      _
    $region51: #{tpu_custom_call.1} parent=1 // pred_check_branch
      %467 = sbr.rel (0) target = $region53
    $region52: #{tpu_custom_call.1} parent=1 // pred_region
      %468 = dma.done [#allocation4], 128
    $region53: #{tpu_custom_call.1} parent=1 // pred_fallthru
      _
    %469 = vsyncpa [#allocation3], 1
    %470 = vsyncpa [#allocation6], 1
    %471 = vsyncpa [#allocation9], 1
    %472 = vsyncpa [#allocation4], 1

</llo_original>
